<compile_context>
chip_gen: v5e
topology: v5e:2x2
jax: 0.10.0
libtpu: 0.0.40
codegen_flags: <defaults>
</compile_context>

<pallas_src>
import functools

import jax
import jax.numpy as jnp
import numpy as np
from jax.experimental import pallas as pl
from jax.experimental.pallas import tpu as pltpu


def _round_up(x: int, m: int) -> int:
    return (x + m - 1) // m * m


def _loss_variance_kernel(x_ref, t_ref, o_ref,
                          sumx_ref, sumx2_ref, cnt_ref,
                          *, max_labels: int, lpad: int):
    # x_ref:  (1, C, T) f32    t_ref: (1, 1, T) int32    o_ref: (1, 1, 1) f32
    # sumx_ref / sumx2_ref: (C, LPAD) f32 scratch, cnt_ref: (8, LPAD) f32 scratch
    h = pl.program_id(1)

    @pl.when(h == 0)
    def _init():
        sumx_ref[...] = jnp.zeros_like(sumx_ref)
        sumx2_ref[...] = jnp.zeros_like(sumx2_ref)
        cnt_ref[...] = jnp.zeros_like(cnt_ref)

    x = x_ref[0]                      # (C, T)
    t = t_ref[0]                      # (1, T) int32
    tile_hw = x.shape[1]

    # One-hot of the labels, label value == sublane row index: (LPAD, T).
    lab = jax.lax.broadcasted_iota(jnp.int32, (lpad, tile_hw), 0)
    onehot_t = (lab == t).astype(jnp.float32)

    # NT contraction over the pixel axis -> per-label sums on the MXU.
    nt_dims = (((1,), (1,)), ((), ()))
    sumx_ref[...] += jax.lax.dot_general(
        x, onehot_t, nt_dims, preferred_element_type=jnp.float32)      # (C, LPAD)
    sumx2_ref[...] += jax.lax.dot_general(
        x * x, onehot_t, nt_dims, preferred_element_type=jnp.float32)  # (C, LPAD)
    ones = jnp.ones((8, tile_hw), jnp.float32)  # 8 identical rows: aligned M dim
    cnt_ref[...] += jax.lax.dot_general(
        ones, onehot_t, nt_dims, preferred_element_type=jnp.float32)   # (8, LPAD)

    @pl.when(h == pl.num_programs(1) - 1)
    def _finalize():
        cnt = cnt_ref[0:1, :]          # (1, LPAD) pixel counts per label
        sx = sumx_ref[...]             # (C, LPAD)
        sx2 = sumx2_ref[...]           # (C, LPAD)

        lane = jax.lax.broadcasted_iota(jnp.int32, (1, lpad), 1)
        valid = (lane >= 1) & (lane <= max_labels)   # label 0 / padding excluded
        present = valid & (cnt > 0.5)                # counted in unique_vals
        multi = valid & (cnt > 1.5)                  # instance.size(1) > 1

        safe_n = jnp.maximum(cnt, 2.0)               # avoid div-by-zero lanes
        inv_n = pl.reciprocal(safe_n, approx=False)
        inv_nm1 = pl.reciprocal(safe_n - 1.0, approx=False)
        # Unbiased per-channel variance, vectorized over all labels at once.
        var_c = (sx2 - sx * sx * inv_n) * inv_nm1    # (C, LPAD)
        var_c = jnp.where(multi, var_c, 0.0)

        sum_var = jnp.sum(var_c)
        n_unique = jnp.sum(present.astype(jnp.float32))
        loss_k = sum_var / (n_unique + 1e-8)
        o_ref[...] = jnp.broadcast_to(loss_k, o_ref.shape).astype(o_ref.dtype)


def loss_variance(x, target, *, max_labels: int, tile_hw: int = 2048):
    """x: (B, C, H, W) float, target: (B, H, W) int instance labels in [0, max_labels]."""
    B, C, H, W = x.shape
    HW = H * W

    lpad = max(128, _round_up(max_labels + 1, 128))     # label (lane) axis, MXU-friendly
    t_hw = _round_up(min(tile_hw, _round_up(HW, 128)), 128)
    hw_pad = _round_up(HW, t_hw)
    num_hw = hw_pad // t_hw

    xr = x.reshape(B, C, HW).astype(jnp.float32)
    tr = target.reshape(B, 1, HW).astype(jnp.int32)
    if hw_pad != HW:
        # Padded pixels get label 0 -> excluded by the valid-label mask.
        xr = jnp.pad(xr, ((0, 0), (0, 0), (0, hw_pad - HW)))
        tr = jnp.pad(tr, ((0, 0), (0, 0), (0, hw_pad - HW)))

    kernel = functools.partial(_loss_variance_kernel,
                               max_labels=max_labels, lpad=lpad)

    per_batch = pl.pallas_call(
        kernel,
        out_shape=jax.ShapeDtypeStruct((B, 1, 1), jnp.float32),
        grid=(B, num_hw),
        in_specs=[
            pl.BlockSpec((1, C, t_hw), lambda b, h: (b, 0, h)),
            pl.BlockSpec((1, 1, t_hw), lambda b, h: (b, 0, h)),
        ],
        out_specs=pl.BlockSpec((1, 1, 1), lambda b, h: (b, 0, 0)),
        scratch_shapes=[
            pltpu.VMEM((C, lpad), jnp.float32),   # sum_x accumulator
            pltpu.VMEM((C, lpad), jnp.float32),   # sum_x^2 accumulator
            pltpu.VMEM((8, lpad), jnp.float32),   # pixel-count accumulator
        ],
        compiler_params=pltpu.CompilerParams(
            dimension_semantics=("parallel", "arbitrary"),
            vmem_limit_bytes=32 * 1024 * 1024,
        ),
    )(xr, tr)

    # loss = (1/B) * sum_k loss_k   (tiny per-batch scalars, mean in plain JAX)
    return jnp.mean(per_batch[:, 0, 0])


def _reference_loss(x, target):
    """Pure numpy re-implementation of the PyTorch forward (for verification)."""
    x = np.asarray(x, dtype=np.float64)
    target = np.asarray(target)
    B, C, H, W = x.shape
    total = 0.0
    for k in range(B):
        tk = target[k].reshape(-1)
        xk = x[k].reshape(C, -1)
        uniq = [v for v in np.unique(tk) if v != 0]
        sum_var = 0.0
        for v in uniq:
            inst = xk[:, tk == v]
            if inst.shape[1] > 1:
                sum_var += inst.var(axis=1, ddof=1).sum()
        total += sum_var / (len(uniq) + 1e-8)
    return total / B


if __name__ == "__main__":
    B, C, H, W = 2, 4, 16, 16
    MAX_LABELS = 6  # synthetic targets use instance labels in [0, MAX_LABELS]

    key = jax.random.PRNGKey(0)
    kx, kt = jax.random.split(key)
    x = jax.random.normal(kx, (B, C, H, W), dtype=jnp.float32)
    target = jax.random.randint(kt, (B, H, W), 0, MAX_LABELS + 1, dtype=jnp.int32)

    loss = loss_variance(x, target, max_labels=MAX_LABELS)
    loss = jax.block_until_ready(loss)

    ref = _reference_loss(np.asarray(x), np.asarray(target))
    np.testing.assert_allclose(float(loss), ref, rtol=1e-4, atol=1e-5)

    print("KERNEL_OK")
</pallas_src>

<mosaic_0001>
module attributes {stable_mosaic.version = 11 : i64} {
  func.func @_loss_variance_kernel(%arg0: i32, %arg1: i32, %arg2: memref<1x4x256xf32, #tpu.memory_space<vmem>>, %arg3: memref<1x1x256xi32, #tpu.memory_space<vmem>>, %arg4: memref<1x1x1xf32, #tpu.memory_space<vmem>>, %arg5: memref<4x128xf32, #tpu.memory_space<vmem>>, %arg6: memref<4x128xf32, #tpu.memory_space<vmem>>, %arg7: memref<8x128xf32, #tpu.memory_space<vmem>>) attributes {dimension_semantics = [#tpu.dimension_semantics<parallel>, #tpu.dimension_semantics<arbitrary>], iteration_bounds = array<i64: 2, 1>, scalar_prefetch = 0 : i64, scratch_operands = 3 : i64, tpu.core_type = #tpu.core_type<tc>, window_params = [{transform_indices = @transform_0, window_bounds = array<i64: 1, 4, 256>}, {transform_indices = @transform_1, window_bounds = array<i64: 1, 1, 256>}, {transform_indices = @transform_2, window_bounds = array<i64: 1, 1, 1>}]} {
    %c0_i32 = arith.constant 0 : i32
    %0 = arith.cmpi eq, %arg1, %c0_i32 : i32
    %1 = arith.extui %0 : i1 to i32
    %c0_i32_0 = arith.constant 0 : i32
    %2 = arith.cmpi ne, %1, %c0_i32_0 : i32
    scf.if %2 {
      %cst_23 = arith.constant 0.000000e+00 : f32
      %29 = vector.broadcast %cst_23 : f32 to vector<4x128xf32>
      %c0_24 = arith.constant 0 : index
      %c0_25 = arith.constant 0 : index
      %30 = vector.load %arg5[%c0_24, %c0_25] : memref<4x128xf32, #tpu.memory_space<vmem>>, vector<4x128xf32>
      tpu.vector_store %arg5[%c0_24, %c0_25], %29 {strides = array<i32>} : memref<4x128xf32, #tpu.memory_space<vmem>>, vector<4x128xf32>,
      %cst_26 = arith.constant 0.000000e+00 : f32
      %31 = vector.broadcast %cst_26 : f32 to vector<4x128xf32>
      %c0_27 = arith.constant 0 : index
      %c0_28 = arith.constant 0 : index
      %32 = vector.load %arg6[%c0_27, %c0_28] : memref<4x128xf32, #tpu.memory_space<vmem>>, vector<4x128xf32>
      tpu.vector_store %arg6[%c0_27, %c0_28], %31 {strides = array<i32>} : memref<4x128xf32, #tpu.memory_space<vmem>>, vector<4x128xf32>,
      %cst_29 = arith.constant 0.000000e+00 : f32
      %33 = vector.broadcast %cst_29 : f32 to vector<8x128xf32>
      %c0_30 = arith.constant 0 : index
      %c0_31 = arith.constant 0 : index
      %34 = vector.load %arg7[%c0_30, %c0_31] : memref<8x128xf32, #tpu.memory_space<vmem>>, vector<8x128xf32>
      tpu.vector_store %arg7[%c0_30, %c0_31], %33 {strides = array<i32>} : memref<8x128xf32, #tpu.memory_space<vmem>>, vector<8x128xf32>,
    } else {
    }
    %c0 = arith.constant 0 : index
    %c0_1 = arith.constant 0 : index
    %c0_2 = arith.constant 0 : index
    %3 = vector.load %arg2[%c0, %c0_1, %c0_2] : memref<1x4x256xf32, #tpu.memory_space<vmem>>, vector<1x4x256xf32>
    %4 = vector.shape_cast %3 : vector<1x4x256xf32> to vector<4x256xf32>
    %c0_3 = arith.constant 0 : index
    %c0_4 = arith.constant 0 : index
    %c0_5 = arith.constant 0 : index
    %5 = vector.load %arg3[%c0_3, %c0_4, %c0_5] : memref<1x1x256xi32, #tpu.memory_space<vmem>>, vector<1x1x256xi32>
    %6 = vector.shape_cast %5 : vector<1x1x256xi32> to vector<1x256xi32>
    %7 = tpu.iota {dimensions = array<i32: 0>} : vector<128x256xi32>
    %8 = vector.broadcast %6 : vector<1x256xi32> to vector<128x256xi32>
    %9 = arith.cmpi eq, %7, %8 : vector<128x256xi32>
    %10 = arith.extui %9 : vector<128x256xi1> to vector<128x256xi32>
    %11 = arith.sitofp %10 : vector<128x256xi32> to vector<128x256xf32>
    %c0_6 = arith.constant 0 : index
    %c0_7 = arith.constant 0 : index
    %12 = vector.load %arg5[%c0_6, %c0_7] : memref<4x128xf32, #tpu.memory_space<vmem>>, vector<4x128xf32>
    %cst = arith.constant dense<0.000000e+00> : vector<4x128xf32>
    %13 = tpu.matmul %4, %11, %cst {dimension_numbers = #tpu.dot_dimension_numbers<[1], [1], [0], [0], [0, 0, 1, 0], [], []>} : vector<4x256xf32>, vector<128x256xf32>, vector<4x128xf32> -> vector<4x128xf32>
    %14 = arith.addf %12, %13 : vector<4x128xf32>
    %c0_8 = arith.constant 0 : index
    %c0_9 = arith.constant 0 : index
    %15 = vector.load %arg5[%c0_8, %c0_9] : memref<4x128xf32, #tpu.memory_space<vmem>>, vector<4x128xf32>
    tpu.vector_store %arg5[%c0_8, %c0_9], %14 {strides = array<i32>} : memref<4x128xf32, #tpu.memory_space<vmem>>, vector<4x128xf32>,
    %c0_10 = arith.constant 0 : index
    %c0_11 = arith.constant 0 : index
    %16 = vector.load %arg6[%c0_10, %c0_11] : memref<4x128xf32, #tpu.memory_space<vmem>>, vector<4x128xf32>
    %17 = arith.mulf %4, %4 : vector<4x256xf32>
    %cst_12 = arith.constant dense<0.000000e+00> : vector<4x128xf32>
    %18 = tpu.matmul %17, %11, %cst_12 {dimension_numbers = #tpu.dot_dimension_numbers<[1], [1], [0], [0], [0, 0, 1, 0], [], []>} : vector<4x256xf32>, vector<128x256xf32>, vector<4x128xf32> -> vector<4x128xf32>
    %19 = arith.addf %16, %18 : vector<4x128xf32>
    %c0_13 = arith.constant 0 : index
    %c0_14 = arith.constant 0 : index
    %20 = vector.load %arg6[%c0_13, %c0_14] : memref<4x128xf32, #tpu.memory_space<vmem>>, vector<4x128xf32>
    tpu.vector_store %arg6[%c0_13, %c0_14], %19 {strides = array<i32>} : memref<4x128xf32, #tpu.memory_space<vmem>>, vector<4x128xf32>,
    %cst_15 = arith.constant 1.000000e+00 : f32
    %21 = vector.broadcast %cst_15 : f32 to vector<8x256xf32>
    %c0_16 = arith.constant 0 : index
    %c0_17 = arith.constant 0 : index
    %22 = vector.load %arg7[%c0_16, %c0_17] : memref<8x128xf32, #tpu.memory_space<vmem>>, vector<8x128xf32>
    %cst_18 = arith.constant dense<0.000000e+00> : vector<8x128xf32>
    %23 = tpu.matmul %21, %11, %cst_18 {dimension_numbers = #tpu.dot_dimension_numbers<[1], [1], [0], [0], [0, 0, 1, 0], [], []>} : vector<8x256xf32>, vector<128x256xf32>, vector<8x128xf32> -> vector<8x128xf32>
    %24 = arith.addf %22, %23 : vector<8x128xf32>
    %c0_19 = arith.constant 0 : index
    %c0_20 = arith.constant 0 : index
    %25 = vector.load %arg7[%c0_19, %c0_20] : memref<8x128xf32, #tpu.memory_space<vmem>>, vector<8x128xf32>
    tpu.vector_store %arg7[%c0_19, %c0_20], %24 {strides = array<i32>} : memref<8x128xf32, #tpu.memory_space<vmem>>, vector<8x128xf32>,
    %c0_i32_21 = arith.constant 0 : i32
    %26 = arith.cmpi eq, %arg1, %c0_i32_21 : i32
    %27 = arith.extui %26 : i1 to i32
    %c0_i32_22 = arith.constant 0 : i32
    %28 = arith.cmpi ne, %27, %c0_i32_22 : i32
    scf.if %28 {
      %c0_23 = arith.constant 0 : index
      %c0_24 = arith.constant 0 : index
      %29 = vector.load %arg7[%c0_23, %c0_24] : memref<8x128xf32, #tpu.memory_space<vmem>>, vector<1x128xf32>
      %c0_25 = arith.constant 0 : index
      %c0_26 = arith.constant 0 : index
      %30 = vector.load %arg5[%c0_25, %c0_26] : memref<4x128xf32, #tpu.memory_space<vmem>>, vector<4x128xf32>
      %c0_27 = arith.constant 0 : index
      %c0_28 = arith.constant 0 : index
      %31 = vector.load %arg6[%c0_27, %c0_28] : memref<4x128xf32, #tpu.memory_space<vmem>>, vector<4x128xf32>
      %32 = tpu.iota {dimensions = array<i32: 1>} : vector<1x128xi32>
      %c1_i32 = arith.constant 1 : i32
      %33 = vector.broadcast %c1_i32 : i32 to vector<1x128xi32>
      %34 = arith.cmpi sge, %32, %33 : vector<1x128xi32>
      %c6_i32 = arith.constant 6 : i32
      %35 = vector.broadcast %c6_i32 : i32 to vector<1x128xi32>
      %36 = arith.cmpi sle, %32, %35 : vector<1x128xi32>
      %37 = arith.andi %34, %36 : vector<1x128xi1>
      %cst_29 = arith.constant 5.000000e-01 : f32
      %38 = vector.broadcast %cst_29 : f32 to vector<1x128xf32>
      %39 = arith.cmpf ogt, %29, %38 : vector<1x128xf32>
      %40 = arith.andi %37, %39 : vector<1x128xi1>
      %cst_30 = arith.constant 1.500000e+00 : f32
      %41 = vector.broadcast %cst_30 : f32 to vector<1x128xf32>
      %42 = arith.cmpf ogt, %29, %41 : vector<1x128xf32>
      %43 = arith.andi %37, %42 : vector<1x128xi1>
      %cst_31 = arith.constant 2.000000e+00 : f32
      %44 = vector.broadcast %cst_31 : f32 to vector<1x128xf32>
      %45 = arith.maximumf %29, %44 : vector<1x128xf32>
      %46 = tpu.reciprocal %45 : vector<1x128xf32> -> vector<1x128xf32>
      %cst_32 = arith.constant 1.000000e+00 : f32
      %47 = vector.broadcast %cst_32 : f32 to vector<1x128xf32>
      %48 = arith.subf %45, %47 : vector<1x128xf32>
      %49 = tpu.reciprocal %48 : vector<1x128xf32> -> vector<1x128xf32>
      %50 = arith.mulf %30, %30 : vector<4x128xf32>
      %51 = vector.broadcast %46 : vector<1x128xf32> to vector<4x128xf32>
      %52 = arith.mulf %50, %51 : vector<4x128xf32>
      %53 = arith.subf %31, %52 : vector<4x128xf32>
      %54 = vector.broadcast %49 : vector<1x128xf32> to vector<4x128xf32>
      %55 = arith.mulf %53, %54 : vector<4x128xf32>
      %cst_33 = arith.constant 0.000000e+00 : f32
      %56 = vector.shape_cast %43 : vector<1x128xi1> to vector<1x128xi1>
      %57 = vector.broadcast %56 : vector<1x128xi1> to vector<4x128xi1>
      %58 = vector.broadcast %cst_33 : f32 to vector<4x128xf32>
      %59 = arith.select %57, %55, %58 : vector<4x128xi1>, vector<4x128xf32>
      %60 = vector.shape_cast %59 : vector<4x128xf32> to vector<1x4x128xf32>
      %cst_34 = arith.constant dense<0.000000e+00> : vector<1xf32>
      %61 = vector.multi_reduction <add>, %60, %cst_34 [1, 2] : vector<1x4x128xf32> to vector<1xf32>
      %62 = vector.shape_cast %61 : vector<1xf32> to vector<1x1x1xf32>
      %63 = vector.extract %62[0, 0, 0] : f32 from vector<1x1x1xf32>
      %64 = arith.extui %40 : vector<1x128xi1> to vector<1x128xi32>
      %65 = arith.sitofp %64 : vector<1x128xi32> to vector<1x128xf32>
      %66 = vector.shape_cast %65 : vector<1x128xf32> to vector<1x1x128xf32>
      %cst_35 = arith.constant dense<0.000000e+00> : vector<1xf32>
      %67 = vector.multi_reduction <add>, %66, %cst_35 [1, 2] : vector<1x1x128xf32> to vector<1xf32>
      %68 = vector.shape_cast %67 : vector<1xf32> to vector<1x1x1xf32>
      %69 = vector.extract %68[0, 0, 0] : f32 from vector<1x1x1xf32>
      %cst_36 = arith.constant 9.99999993E-9 : f32
      %70 = arith.addf %69, %cst_36 : f32
      %71 = arith.divf %63, %70 : f32
      %72 = vector.broadcast %71 : f32 to vector<1x1x1xf32>
      %c0_37 = arith.constant 0 : index
      %c0_38 = arith.constant 0 : index
      %c0_39 = arith.constant 0 : index
      %73 = vector.load %arg4[%c0_37, %c0_38, %c0_39] : memref<1x1x1xf32, #tpu.memory_space<vmem>>, vector<1x1x1xf32>
      tpu.vector_store %arg4[%c0_37, %c0_38, %c0_39], %72 {strides = array<i32>} : memref<1x1x1xf32, #tpu.memory_space<vmem>>, vector<1x1x1xf32>,
    } else {
    }
    return
  }
  func.func @transform_0(%arg0: i32, %arg1: i32) -> (i32, i32, i32) {
    %c0_i32 = arith.constant 0 : i32
    %c0_i32_0 = arith.constant 0 : i32
    return %arg0, %c0_i32, %arg1 : i32, i32, i32
  }
  func.func @transform_1(%arg0: i32, %arg1: i32) -> (i32, i32, i32) {
    %c0_i32 = arith.constant 0 : i32
    %c0_i32_0 = arith.constant 0 : i32
    return %arg0, %c0_i32, %arg1 : i32, i32, i32
  }
  func.func @transform_2(%arg0: i32, %arg1: i32) -> (i32, i32, i32) {
    %c0_i32 = arith.constant 0 : i32
    %c0_i32_0 = arith.constant 0 : i32
    %c0_i32_1 = arith.constant 0 : i32
    return %arg0, %c0_i32, %c0_i32_0 : i32, i32, i32
  }
}

</mosaic_0001>

<llo_original>
// kernel: tpu_custom_call.1
$region0: #{tpu_custom_call.1}
  #allocation0 [shape = 'u32[]', space=smem, size = 0x4, offset = 0x4, fixed_abs, tag = 'smem constant byte address 0x4 - core index']
  #allocation1 [shape = 'u32[72,128]{1,0:T(1,128)}', space=vmem, size = 0x9000, scoped, tag = 'internal scratch']
  #allocation2 [shape = 'f32[4,128]{1,0:T(4,128)}', space=vmem, size = 0x800, scoped, tag = 'scratch operand']
  #allocation3 [shape = 'f32[4,128]{1,0:T(4,128)}', space=vmem, size = 0x800, scoped, tag = 'scratch operand']
  #allocation4 [shape = 'f32[8,128]{1,0:T(8,128)}', space=vmem, size = 0x1000, scoped, tag = 'scratch operand']
  %s0 = inlined_call_operand.hbm [shape: f32[2,4,256], index: 0, kind: input, shape index: {}]
  %s1 = inlined_call_operand.hbm [shape: s32[2,1,256], index: 1, kind: input, shape index: {}]
  %s2 = inlined_call_operand.vmem [shape: f32[2,1,1], index: 2, kind: output, shape index: {}]
  %s3 = sld [smem:[#allocation0]]
  $region57: #{tpu_custom_call.1} parent=0
    _
  %s5 = ssub.s32 1, %s3
  %s6 = scalar_select 0, %s5, %s3
  $region1: #{tpu_custom_call.1} parent=0
    #allocation5 [shape = 'u8[8192]{0}', space=vmem, size = 0x2000, scoped, tag = 'input window, operand 0']
    #allocation6 [shape = 's32[2]{0}', space=sflag, size = 0x8, scoped, tag = 'scoped memory for tpu_custom_call.1']
    #allocation7 [shape = 'u8[2048]{0}', space=vmem, size = 0x800, scoped, tag = 'input window, operand 1']
    #allocation8 [shape = 's32[2]{0}', space=sflag, size = 0x8, scoped, tag = 'scoped memory for tpu_custom_call.1']
    %7 = vsyncpa [#allocation6], 0
    %s8 = scalar_lea.sflag [#allocation6], 1
    %9 = vsyncpa %s8, 0
    %10 = vsyncpa [#allocation8], 0
    %s11 = scalar_lea.sflag [#allocation8], 1
    %12 = vsyncpa %s11, 0
    loop: start=0, step=1, limit=4
    $region2: #{tpu_custom_call.1} parent=1 // loop_pre_header
      _
    $region3: #{tpu_custom_call.1} parent=1 // loop_header
      %s14 = sphi 0, %s18
      %p15 = scmp.ge.s32.totalorder %s14, 4
      %s21 = sphi 0, %s33
      %s22 = sphi 0, %s29
      %s23 = sphi 0, %s21
      %s24 = sphi 0, %s22
      %s25 = sphi 0, %s23
      %s26 = sphi 0, %s24
      %s38 = sphi 0, %s40
      %s41 = sphi 0, %s38
      %s42 = sphi 0, %s41
      %s58 = sphi 0, %s42
      %s66 = sphi 0, %s68
      %s69 = sphi 0, %s66
      %s70 = sphi 0, %s69
      %s86 = sphi 0, %s70
      %s92 = sphi 0, %s94
      %s95 = sphi 0, %s92
      %s96 = sphi 0, %s95
      %s112 = sphi 0, %s96
    $region4: #{tpu_custom_call.1} parent=1 // loop_header_branch
      %17 = sbr.rel (%p15) target = $region8
    $region5: #{tpu_custom_call.1} parent=1 // loop_body
      %s19 = ssub.s32 %s14, 1
      %s20 = ssub.s32 %s14, 2
      %s27 = sadd.s32 1, %s22
      %p28 = scmp.ge.s32.totalorder %s27, 1
      %s29 = scalar_select %p28, 0, %s27
      %s30 = sadd.s32 1, %s21
      %s31 = scalar_select %p28, %s30, %s21
      %p32 = scmp.ge.s32.totalorder %s31, 2
      %s33 = scalar_select %p32, 0, %s31
      %s34 = ssub.s32 %s21, %s33
      %s35 = ssub.s32 %s22, %s29
      %s36 = sor.u32 %s34, %s35
      %p37 = scmp.eq.s32.totalorder %s36, 0
      %s39 = sadd.s32 %s38, 1
      %s40 = scalar_select %p37, %s38, %s39
      %p43 = pneg %p37
      %p44 = scmp.eq.s32.totalorder %s14, 1
      %p45 = por %p43, %p44
      %p46 = scmp.ne.s32.totalorder %s38, %s41
      %p47 = scmp.eq.s32.totalorder %s14, 0
      %p48 = por %p46, %p47
      %p49 = scmp.ne.s32.totalorder %s38, %s41
      %p50 = scmp.eq.s32.totalorder %s19, 1
      %p51 = por %p49, %p50
      %p52 = scmp.ne.s32.totalorder %s41, %s42
      %p53 = scmp.eq.s32.totalorder %s19, 0
      %p54 = por %p52, %p53
      %p55 = scmp.ne.s32.totalorder %s41, %s42
      %p56 = scmp.eq.s32.totalorder %s20, 1
      %p57 = por %p55, %p56
      %p59 = scmp.ne.s32.totalorder %s42, %s58
      %p60 = scmp.eq.s32.totalorder %s20, 0
      %p61 = por %p59, %p60
      %s62 = ssub.s32 %s21, %s33
      %s63 = ssub.s32 %s22, %s29
      %s64 = sor.u32 %s62, %s63
      %p65 = scmp.eq.s32.totalorder %s64, 0
      %s67 = sadd.s32 %s66, 1
      %s68 = scalar_select %p65, %s66, %s67
      %p71 = pneg %p65
      %p72 = scmp.eq.s32.totalorder %s14, 1
      %p73 = por %p71, %p72
      %p74 = scmp.ne.s32.totalorder %s66, %s69
      %p75 = scmp.eq.s32.totalorder %s14, 0
      %p76 = por %p74, %p75
      %p77 = scmp.ne.s32.totalorder %s66, %s69
      %p78 = scmp.eq.s32.totalorder %s19, 1
      %p79 = por %p77, %p78
      %p80 = scmp.ne.s32.totalorder %s69, %s70
      %p81 = scmp.eq.s32.totalorder %s19, 0
      %p82 = por %p80, %p81
      %p83 = scmp.ne.s32.totalorder %s69, %s70
      %p84 = scmp.eq.s32.totalorder %s20, 1
      %p85 = por %p83, %p84
      %p87 = scmp.ne.s32.totalorder %s70, %s86
      %p88 = scmp.eq.s32.totalorder %s20, 0
      %p89 = por %p87, %p88
      %s90 = ssub.s32 %s21, %s33
      %p91 = scmp.eq.s32.totalorder %s90, 0
      %s93 = sadd.s32 %s92, 1
      %s94 = scalar_select %p91, %s92, %s93
      %p97 = pneg %p91
      %p98 = scmp.eq.s32.totalorder %s14, 1
      %p99 = por %p97, %p98
      %p100 = scmp.ne.s32.totalorder %s92, %s95
      %p101 = scmp.eq.s32.totalorder %s14, 0
      %p102 = por %p100, %p101
      %p103 = scmp.ne.s32.totalorder %s92, %s95
      %p104 = scmp.eq.s32.totalorder %s19, 1
      %p105 = por %p103, %p104
      %p106 = scmp.ne.s32.totalorder %s95, %s96
      %p107 = scmp.eq.s32.totalorder %s19, 0
      %p108 = por %p106, %p107
      %p109 = scmp.ne.s32.totalorder %s95, %s96
      %p110 = scmp.eq.s32.totalorder %s20, 1
      %p111 = por %p109, %p110
      %p113 = scmp.ne.s32.totalorder %s96, %s112
      %p114 = scmp.eq.s32.totalorder %s20, 0
      %p115 = por %p113, %p114
      %p116 = scmp.le.s32.totalorder 1, %s14
      %p117 = scmp.lt.s32.totalorder %s14, 3
      %p118 = pnand %p116, %p117
      %p119 = pneg %p118
      // Predicated region
      $region9: #{tpu_custom_call.1} parent=5 // pred_check
        _
      $region10: #{tpu_custom_call.1} parent=5 // pred_check_branch
        %121 = sbr.rel (%p118) target = $region12
      $region11: #{tpu_custom_call.1} parent=5 // pred_region
        %s122 = ssub.s32 %s14, 1
      $region12: #{tpu_custom_call.1} parent=5 // pred_fallthru
        _
      %p123 = scmp.lt.s32.totalorder %s14, 2
      // Predicated region
      $region13: #{tpu_custom_call.1} parent=5 // pred_check
        %p124 = pneg %p123
      $region14: #{tpu_custom_call.1} parent=5 // pred_check_branch
        %126 = sbr.rel (%p124) target = $region16
      $region15: #{tpu_custom_call.1} parent=5 // pred_region
        // Predicated region
        $region17: #{tpu_custom_call.1} parent=15 // pred_check
          %p127 = pneg %p48
        $region18: #{tpu_custom_call.1} parent=15 // pred_check_branch
          %129 = sbr.rel (%p127) target = $region20
        $region19: #{tpu_custom_call.1} parent=15 // pred_region
          %s130 = sand.u32 %s38, 1
          %s131 = scalar_lea.sflag [#allocation6], %s130
          %s132 = sand.u32 %s38, 1
          %s133 = smul.addr %s132, 8
          %s134 = scalar_lea.vmem [#allocation5], %s133
          %s135 = smul.u32 2, %s22
          %137 = vsyncadd %s131, 0
          %s138 = smul.addr %s21, 2
          %s139 = sadd.s32 %s135, %s138
          %s140 = smul.addr %s139, 4
          %s141 = scalar_lea.hbm %s0, %s140
          %s143 = sshll.u32 %s141, 4
          %s144 = int_to_ptr.hbm [resolvable:$true] %s143
          %s145 = sshll.u32 %s134, 4
          %s146 = int_to_ptr.vmem [resolvable:$true] %s145
          %148 = dma.hbm_to_vmem [thread:$0]  %s144, 128, %s146, %s131
        $region20: #{tpu_custom_call.1} parent=15 // pred_fallthru
          _
        // Predicated region
        $region21: #{tpu_custom_call.1} parent=15 // pred_check
          %p149 = pneg %p76
        $region22: #{tpu_custom_call.1} parent=15 // pred_check_branch
          %151 = sbr.rel (%p149) target = $region24
        $region23: #{tpu_custom_call.1} parent=15 // pred_region
          %s152 = sand.u32 %s66, 1
          %s153 = scalar_lea.sflag [#allocation8], %s152
          %s154 = sand.u32 %s66, 1
          %s155 = smul.addr %s154, 2
          %s156 = scalar_lea.vmem [#allocation7], %s155
          %s157 = smul.u32 2, %s22
          %159 = vsyncadd %s153, 0
          %s160 = smul.addr %s21, 2
          %s161 = sadd.s32 %s157, %s160
          %s162 = scalar_lea.hbm %s1, %s161
          %s164 = sshll.u32 %s162, 4
          %s165 = int_to_ptr.hbm [resolvable:$true] %s164
          %s166 = sshll.u32 %s156, 4
          %s167 = int_to_ptr.vmem [resolvable:$true] %s166
          %169 = dma.hbm_to_vmem [thread:$0]  %s165, 32, %s167, %s153
        $region24: #{tpu_custom_call.1} parent=15 // pred_fallthru
          _
      $region16: #{tpu_custom_call.1} parent=5 // pred_fallthru
        _
      %p170 = scmp.le.s32.totalorder 1, %s14
      %p171 = scmp.lt.s32.totalorder %s14, 3
      %p172 = pnand %p170, %p171
      %p173 = pneg %p172
      // Predicated region
      $region25: #{tpu_custom_call.1} parent=5 // pred_check
        _
      $region26: #{tpu_custom_call.1} parent=5 // pred_check_branch
        %175 = sbr.rel (%p172) target = $region28
      $region27: #{tpu_custom_call.1} parent=5 // pred_region
        %s176 = ssub.s32 %s14, 1
        %s177 = sand.u32 %s41, 1
        %s178 = scalar_lea.sflag [#allocation6], %s177
        %s179 = sand.u32 %s41, 1
        %s180 = smul.addr %s179, 8
        %s181 = scalar_lea.vmem [#allocation5], %s180
        // Predicated region
        $region29: #{tpu_custom_call.1} parent=27 // pred_check
          %p182 = pneg %p54
        $region30: #{tpu_custom_call.1} parent=27 // pred_check_branch
          %184 = sbr.rel (%p182) target = $region32
        $region31: #{tpu_custom_call.1} parent=27 // pred_region
          %186 = dma.done %s178, 128
        $region32: #{tpu_custom_call.1} parent=27 // pred_fallthru
          _
        %s187 = sand.u32 %s69, 1
        %s188 = scalar_lea.sflag [#allocation8], %s187
        %s189 = sand.u32 %s69, 1
        %s190 = smul.addr %s189, 2
        %s191 = scalar_lea.vmem [#allocation7], %s190
        // Predicated region
        $region33: #{tpu_custom_call.1} parent=27 // pred_check
          %p192 = pneg %p82
        $region34: #{tpu_custom_call.1} parent=27 // pred_check_branch
          %194 = sbr.rel (%p192) target = $region36
        $region35: #{tpu_custom_call.1} parent=27 // pred_region
          %196 = dma.done %s188, 32
        $region36: #{tpu_custom_call.1} parent=27 // pred_fallthru
          _
        %s197 = sand.u32 %s41, 1
        %s198 = scalar_lea.sflag [#allocation6], %s197
        %s199 = sand.u32 %s41, 1
        %s200 = smul.addr %s199, 8
        %s201 = scalar_lea.vmem [#allocation5], %s200
        %p202 = pneg %p54
        %p203 = pneg %p51
        %s204 = sand.u32 %s69, 1
        %s205 = scalar_lea.sflag [#allocation8], %s204
        %s206 = sand.u32 %s69, 1
        %s207 = smul.addr %s206, 2
        %s208 = scalar_lea.vmem [#allocation7], %s207
        %p209 = pneg %p82
        %p210 = pneg %p79
        %p211 = pneg %p108
        %p212 = pneg %p105
        %p213 = scmp.lt.s32.totalorder %s23, 1
        %s214 = scalar_select %p213, %s23, 1
        %s215 = scalar_lea.vmem %s2, %s214
        %s216 = smul.u32 2, %s24
        %s217 = smul.u32 2, %s24
        %p218 = scmp.lt.s32.totalorder %s23, 1
        %s219 = scalar_select %p218, %s23, 1
        %s220 = scalar_lea.vmem %s2, %s219
        %p221 = scmp.eq.s32.totalorder %s24, 0
        // Predicated region
        $region37: #{tpu_custom_call.1} parent=27 // pred_check
          %p222 = pneg %p221
        $region38: #{tpu_custom_call.1} parent=27 // pred_check_branch
          %224 = sbr.rel (%p222) target = $region40
        $region39: #{tpu_custom_call.1} parent=27 // pred_region
          %225 = vst [vmem:[#allocation2] sm:$0xf] 0.0
          %226 = vst [vmem:[#allocation3] sm:$0xf] 0.0
          %227 = vst [vmem:[#allocation4] sm:$0xff] 0.0
        $region40: #{tpu_custom_call.1} parent=27 // pred_fallthru
          _
        %v228 = vld [vmem:[%s181] sm:$0xff]
        %v229 = vld [vmem:[%s191] sm:$0x3]
        %v230 = vlaneseq
        %v231 = vshrl.u32 %v230, 7
        %v232 = vadd.s32 %v231, 8
        %v233 = vadd.s32 %v231, 16
        %v234 = vadd.s32 %v231, 24
        %v235 = vadd.s32 %v231, 32
        %v236 = vadd.s32 %v231, 40
        %v237 = vadd.s32 %v231, 48
        %v238 = vadd.s32 %v231, 56
        %v239 = vadd.s32 %v231, 64
        %v240 = vadd.s32 %v231, 72
        %v241 = vadd.s32 %v231, 80
        %v242 = vadd.s32 %v231, 88
        %v243 = vadd.s32 %v231, 96
        %v244 = vadd.s32 %v231, 104
        %v245 = vadd.s32 %v231, 112
        %v246 = vadd.s32 %v231, 120
        %v247 = vperm.slane %v229, 0
        %v248 = vperm.slane %v229, 1
        %vm249 = vcmp.eq.s32.totalorder %v231, %v247
        %vm250 = vcmp.eq.s32.totalorder %v231, %v248
        %vm251 = vcmp.eq.s32.totalorder %v232, %v247
        %vm252 = vcmp.eq.s32.totalorder %v232, %v248
        %vm253 = vcmp.eq.s32.totalorder %v233, %v247
        %vm254 = vcmp.eq.s32.totalorder %v233, %v248
        %vm255 = vcmp.eq.s32.totalorder %v234, %v247
        %vm256 = vcmp.eq.s32.totalorder %v234, %v248
        %vm257 = vcmp.eq.s32.totalorder %v235, %v247
        %vm258 = vcmp.eq.s32.totalorder %v235, %v248
        %vm259 = vcmp.eq.s32.totalorder %v236, %v247
        %vm260 = vcmp.eq.s32.totalorder %v236, %v248
        %vm261 = vcmp.eq.s32.totalorder %v237, %v247
        %vm262 = vcmp.eq.s32.totalorder %v237, %v248
        %vm263 = vcmp.eq.s32.totalorder %v238, %v247
        %vm264 = vcmp.eq.s32.totalorder %v238, %v248
        %vm265 = vcmp.eq.s32.totalorder %v239, %v247
        %vm266 = vcmp.eq.s32.totalorder %v239, %v248
        %vm267 = vcmp.eq.s32.totalorder %v240, %v247
        %vm268 = vcmp.eq.s32.totalorder %v240, %v248
        %vm269 = vcmp.eq.s32.totalorder %v241, %v247
        %vm270 = vcmp.eq.s32.totalorder %v241, %v248
        %vm271 = vcmp.eq.s32.totalorder %v242, %v247
        %vm272 = vcmp.eq.s32.totalorder %v242, %v248
        %vm273 = vcmp.eq.s32.totalorder %v243, %v247
        %vm274 = vcmp.eq.s32.totalorder %v243, %v248
        %vm275 = vcmp.eq.s32.totalorder %v244, %v247
        %vm276 = vcmp.eq.s32.totalorder %v244, %v248
        %vm277 = vcmp.eq.s32.totalorder %v245, %v247
        %vm278 = vcmp.eq.s32.totalorder %v245, %v248
        %vm279 = vcmp.eq.s32.totalorder %v246, %v247
        %vm280 = vcmp.eq.s32.totalorder %v246, %v248
        %v281 = vsel %vm249, 1, 0
        %v282 = vsel %vm250, 1, 0
        %v283 = vsel %vm251, 1, 0
        %v284 = vsel %vm252, 1, 0
        %v285 = vsel %vm253, 1, 0
        %v286 = vsel %vm254, 1, 0
        %v287 = vsel %vm255, 1, 0
        %v288 = vsel %vm256, 1, 0
        %v289 = vsel %vm257, 1, 0
        %v290 = vsel %vm258, 1, 0
        %v291 = vsel %vm259, 1, 0
        %v292 = vsel %vm260, 1, 0
        %v293 = vsel %vm261, 1, 0
        %v294 = vsel %vm262, 1, 0
        %v295 = vsel %vm263, 1, 0
        %v296 = vsel %vm264, 1, 0
        %v297 = vsel %vm265, 1, 0
        %v298 = vsel %vm266, 1, 0
        %v299 = vsel %vm267, 1, 0
        %v300 = vsel %vm268, 1, 0
        %v301 = vsel %vm269, 1, 0
        %v302 = vsel %vm270, 1, 0
        %v303 = vsel %vm271, 1, 0
        %v304 = vsel %vm272, 1, 0
        %v305 = vsel %vm273, 1, 0
        %v306 = vsel %vm274, 1, 0
        %v307 = vsel %vm275, 1, 0
        %v308 = vsel %vm276, 1, 0
        %v309 = vsel %vm277, 1, 0
        %v310 = vsel %vm278, 1, 0
        %v311 = vsel %vm279, 1, 0
        %v312 = vsel %vm280, 1, 0
        %v313 = vcvt.s32.f32 %v281
        %v314 = vcvt.s32.f32 %v282
        %v315 = vcvt.s32.f32 %v283
        %v316 = vcvt.s32.f32 %v284
        %v317 = vcvt.s32.f32 %v285
        %v318 = vcvt.s32.f32 %v286
        %v319 = vcvt.s32.f32 %v287
        %v320 = vcvt.s32.f32 %v288
        %v321 = vcvt.s32.f32 %v289
        %v322 = vcvt.s32.f32 %v290
        %v323 = vcvt.s32.f32 %v291
        %v324 = vcvt.s32.f32 %v292
        %v325 = vcvt.s32.f32 %v293
        %v326 = vcvt.s32.f32 %v294
        %v327 = vcvt.s32.f32 %v295
        %v328 = vcvt.s32.f32 %v296
        %v329 = vcvt.s32.f32 %v297
        %v330 = vcvt.s32.f32 %v298
        %v331 = vcvt.s32.f32 %v299
        %v332 = vcvt.s32.f32 %v300
        %v333 = vcvt.s32.f32 %v301
        %v334 = vcvt.s32.f32 %v302
        %v335 = vcvt.s32.f32 %v303
        %v336 = vcvt.s32.f32 %v304
        %v337 = vcvt.s32.f32 %v305
        %v338 = vcvt.s32.f32 %v306
        %v339 = vcvt.s32.f32 %v307
        %v340 = vcvt.s32.f32 %v308
        %v341 = vcvt.s32.f32 %v309
        %v342 = vcvt.s32.f32 %v310
        %v343 = vcvt.s32.f32 %v311
        %v344 = vcvt.s32.f32 %v312
        %v345 = vld [vmem:[#allocation2] sm:$0xf]
        %347 = vst [vmem:[#allocation1] ss:$2 sm:$0xff] %v228
        %v348 = vld.sshfl [vmem:[#allocation1] sm:$0xff pattern:$0x75316420]
        %v349 = vld.sshfl [vmem:[#allocation1 + $0x8] sm:$0xff pattern:$0x75316420]
        %352 = vmatpush.xpose.msra.mxu0 %v343
        %353 = vmatpush.xpose.msra.mxu0 %v341
        %354 = vmatpush.xpose.msra.mxu0 %v339
        %355 = vmatpush.xpose.msra.mxu0 %v337
        %356 = vmatpush.xpose.msra.mxu0 %v335
        %357 = vmatpush.xpose.msra.mxu0 %v333
        %358 = vmatpush.xpose.msra.mxu0 %v331
        %359 = vmatpush.xpose.msra.mxu0 %v329
        %360 = vmatpush.xpose.msra.mxu0 %v327
        %361 = vmatpush.xpose.msra.mxu0 %v325
        %362 = vmatpush.xpose.msra.mxu0 %v323
        %363 = vmatpush.xpose.msra.mxu0 %v321
        %364 = vmatpush.xpose.msra.mxu0 %v319
        %365 = vmatpush.xpose.msra.mxu0 %v317
        %366 = vmatpush.xpose.msra.mxu0 %v315
        %367 = vmatpush.xpose.msra.mxu0 %v313
        %368 = vmatmul.f32.gmra.mxu0 %v348
        %v369 = vpop.f32.mrf.mxu0
        %v370 = vadd.f32 0.0, %v369
        %371 = vdwg.mxu0
        %372 = vmatpush.xpose.msra.mxu0 %v344
        %373 = vmatpush.xpose.msra.mxu0 %v342
        %374 = vmatpush.xpose.msra.mxu0 %v340
        %375 = vmatpush.xpose.msra.mxu0 %v338
        %376 = vmatpush.xpose.msra.mxu0 %v336
        %377 = vmatpush.xpose.msra.mxu0 %v334
        %378 = vmatpush.xpose.msra.mxu0 %v332
        %379 = vmatpush.xpose.msra.mxu0 %v330
        %380 = vmatpush.xpose.msra.mxu0 %v328
        %381 = vmatpush.xpose.msra.mxu0 %v326
        %382 = vmatpush.xpose.msra.mxu0 %v324
        %383 = vmatpush.xpose.msra.mxu0 %v322
        %384 = vmatpush.xpose.msra.mxu0 %v320
        %385 = vmatpush.xpose.msra.mxu0 %v318
        %386 = vmatpush.xpose.msra.mxu0 %v316
        %387 = vmatpush.xpose.msra.mxu0 %v314
        %388 = vmatmul.f32.gmra.mxu0 %v349
        %v389 = vpop.f32.mrf.mxu0
        %v390 = vadd.f32 %v370, %v389
        %391 = vdwg.mxu0
        %v392 = vadd.f32 %v345, %v390
        %393 = vst [vmem:[#allocation2] sm:$0xf] %v392
        %v394 = vld [vmem:[#allocation3] sm:$0xf]
        %v395 = vmul.f32 %v228, %v228
        %397 = vst [vmem:[#allocation1] ss:$2 sm:$0xff] %v395
        %v398 = vld.sshfl [vmem:[#allocation1] sm:$0xff pattern:$0x75316420]
        %v399 = vld.sshfl [vmem:[#allocation1 + $0x8] sm:$0xff pattern:$0x75316420]
        %402 = vmatpush.xpose.msra.mxu0 %v343
        %403 = vmatpush.xpose.msra.mxu0 %v341
        %404 = vmatpush.xpose.msra.mxu0 %v339
        %405 = vmatpush.xpose.msra.mxu0 %v337
        %406 = vmatpush.xpose.msra.mxu0 %v335
        %407 = vmatpush.xpose.msra.mxu0 %v333
        %408 = vmatpush.xpose.msra.mxu0 %v331
        %409 = vmatpush.xpose.msra.mxu0 %v329
        %410 = vmatpush.xpose.msra.mxu0 %v327
        %411 = vmatpush.xpose.msra.mxu0 %v325
        %412 = vmatpush.xpose.msra.mxu0 %v323
        %413 = vmatpush.xpose.msra.mxu0 %v321
        %414 = vmatpush.xpose.msra.mxu0 %v319
        %415 = vmatpush.xpose.msra.mxu0 %v317
        %416 = vmatpush.xpose.msra.mxu0 %v315
        %417 = vmatpush.xpose.msra.mxu0 %v313
        %418 = vmatmul.f32.gmra.mxu0 %v398
        %v419 = vpop.f32.mrf.mxu0
        %v420 = vadd.f32 0.0, %v419
        %421 = vdwg.mxu0
        %422 = vmatpush.xpose.msra.mxu0 %v344
        %423 = vmatpush.xpose.msra.mxu0 %v342
        %424 = vmatpush.xpose.msra.mxu0 %v340
        %425 = vmatpush.xpose.msra.mxu0 %v338
        %426 = vmatpush.xpose.msra.mxu0 %v336
        %427 = vmatpush.xpose.msra.mxu0 %v334
        %428 = vmatpush.xpose.msra.mxu0 %v332
        %429 = vmatpush.xpose.msra.mxu0 %v330
        %430 = vmatpush.xpose.msra.mxu0 %v328
        %431 = vmatpush.xpose.msra.mxu0 %v326
        %432 = vmatpush.xpose.msra.mxu0 %v324
        %433 = vmatpush.xpose.msra.mxu0 %v322
        %434 = vmatpush.xpose.msra.mxu0 %v320
        %435 = vmatpush.xpose.msra.mxu0 %v318
        %436 = vmatpush.xpose.msra.mxu0 %v316
        %437 = vmatpush.xpose.msra.mxu0 %v314
        %438 = vmatmul.f32.gmra.mxu0 %v399
        %v439 = vpop.f32.mrf.mxu0
        %v440 = vadd.f32 %v420, %v439
        %441 = vdwg.mxu0
        %v442 = vadd.f32 %v394, %v440
        %443 = vst [vmem:[#allocation3] sm:$0xf] %v442
        %v444 = vld [vmem:[#allocation4] sm:$0xff]
        %445 = vmatpush.xpose.msra.mxu0 %v343
        %446 = vmatpush.xpose.msra.mxu0 %v341
        %447 = vmatpush.xpose.msra.mxu0 %v339
        %448 = vmatpush.xpose.msra.mxu0 %v337
        %449 = vmatpush.xpose.msra.mxu0 %v335
        %450 = vmatpush.xpose.msra.mxu0 %v333
        %451 = vmatpush.xpose.msra.mxu0 %v331
        %452 = vmatpush.xpose.msra.mxu0 %v329
        %453 = vmatpush.xpose.msra.mxu0 %v327
        %454 = vmatpush.xpose.msra.mxu0 %v325
        %455 = vmatpush.xpose.msra.mxu0 %v323
        %456 = vmatpush.xpose.msra.mxu0 %v321
        %457 = vmatpush.xpose.msra.mxu0 %v319
        %458 = vmatpush.xpose.msra.mxu0 %v317
        %459 = vmatpush.xpose.msra.mxu0 %v315
        %460 = vmatpush.xpose.msra.mxu0 %v313
        %461 = vmatmul.f32.gmra.mxu0 1.0
        %v462 = vpop.f32.mrf.mxu0
        %v463 = vadd.f32 0.0, %v462
        %464 = vdwg.mxu0
        %465 = vmatpush.xpose.msra.mxu0 %v344
        %466 = vmatpush.xpose.msra.mxu0 %v342
        %467 = vmatpush.xpose.msra.mxu0 %v340
        %468 = vmatpush.xpose.msra.mxu0 %v338
        %469 = vmatpush.xpose.msra.mxu0 %v336
        %470 = vmatpush.xpose.msra.mxu0 %v334
        %471 = vmatpush.xpose.msra.mxu0 %v332
        %472 = vmatpush.xpose.msra.mxu0 %v330
        %473 = vmatpush.xpose.msra.mxu0 %v328
        %474 = vmatpush.xpose.msra.mxu0 %v326
        %475 = vmatpush.xpose.msra.mxu0 %v324
        %476 = vmatpush.xpose.msra.mxu0 %v322
        %477 = vmatpush.xpose.msra.mxu0 %v320
        %478 = vmatpush.xpose.msra.mxu0 %v318
        %479 = vmatpush.xpose.msra.mxu0 %v316
        %480 = vmatpush.xpose.msra.mxu0 %v314
        %481 = vmatmul.f32.gmra.mxu0 1.0
        %v482 = vpop.f32.mrf.mxu0
        %v483 = vadd.f32 %v463, %v482
        %484 = vdwg.mxu0
        %v485 = vadd.f32 %v444, %v483
        %486 = vst [vmem:[#allocation4] sm:$0xff] %v485
        // Predicated region
        $region41: #{tpu_custom_call.1} parent=27 // pred_check
          %p487 = pneg %p221
        $region42: #{tpu_custom_call.1} parent=27 // pred_check_branch
          %489 = sbr.rel (%p487) target = $region44
        $region43: #{tpu_custom_call.1} parent=27 // pred_region
          %v490 = vld [vmem:[#allocation4] sm:$0x1]
          %v491 = vld [vmem:[#allocation2] sm:$0xf]
          %v492 = vld [vmem:[#allocation3] sm:$0xf]
          %v493 = vlaneseq
          %v494 = vand.u32 %v493, 127
          %vm495 = vcmp.ge.s32.totalorder %v494, 1
          %vm496 = vcmp.le.s32.totalorder %v494, 6
          %vm497 = vmand %vm495, %vm496
          %vm498 = vcmp.gt.f32.partialorder %v490, 0.5
          %vm499 = vmand %vm497, %vm498
          %vm500 = vcmp.gt.f32.partialorder %v490, 1.5
          %vm501 = vmand %vm497, %vm500
          %v502 = vmax.f32 %v490, 2.0
          %v503 = vrcp.pop %v502
          %v504 = vmul.f32 %v502, %v503
          %v505 = vsub.f32 1.0, %v504
          %v506 = vmul.f32 %v503, %v505
          %v507 = vadd.f32 %v503, %v506
          %vm508 = vweird.f32 %v502
          %vm509 = vweird.f32 %v503
          %vm510 = vmor %vm508, %vm509
          %v511 = vsel %vm510, %v503, %v507
          %v512 = vand.u32 2147483647, %v502
          %vm513 = vcmp.eq.f32.partialorder %v512, 8.507059e+37
          %v514 = vand.u32 %v502, 2147483648
          %v515 = vor.u32 1.1754944e-38, %v514
          %v516 = vsel %vm513, %v515, %v511
          %v517 = vsub.f32 %v502, 1.0
          %v518 = vrcp.pop %v517
          %v519 = vmul.f32 %v517, %v518
          %v520 = vsub.f32 1.0, %v519
          %v521 = vmul.f32 %v518, %v520
          %v522 = vadd.f32 %v518, %v521
          %vm523 = vweird.f32 %v517
          %vm524 = vweird.f32 %v518
          %vm525 = vmor %vm523, %vm524
          %v526 = vsel %vm525, %v518, %v522
          %v527 = vand.u32 2147483647, %v517
          %vm528 = vcmp.eq.f32.partialorder %v527, 8.507059e+37
          %v529 = vand.u32 %v517, 2147483648
          %v530 = vor.u32 1.1754944e-38, %v529
          %v531 = vsel %vm528, %v530, %v526
          %v532 = vmul.f32 %v491, %v491
          %v533 = vperm.slane %v516, 0
          %v534 = vmul.f32 %v532, %v533
          %v535 = vsub.f32 %v492, %v534
          %v536 = vperm.slane %v531, 0
          %v537 = vmul.f32 %v535, %v536
          %v538 = vsel %vm501, 1, 0
          %v539 = vperm.slane %v538, 0
          %vm540 = vcmp.eq.s32.totalorder %v539, 1
          %v541 = vsel %vm540, %v537, 0.0
          %vm542 = vcmask 1043456
          %v543 = vsel %vm542, %v541, 0.0
          %544 = vadd.xlane.f32.xlu0 %v543
          %v545 = vpop.xlane.xlu0 %544
          %v546 = vrot.slane %v545, 4
          %v547 = vadd.f32 %v545, %v546
          %v548 = vrot.slane %v547, 2
          %v549 = vadd.f32 %v547, %v548
          %v550 = vrot.slane %v549, 1
          %v551 = vadd.f32 %v549, %v550
          %s552 = vtos %v551
          %v553 = vsel %vm499, 1, 0
          %v554 = vcvt.s32.f32 %v553
          %vm555 = vcmask 1040384
          %v556 = vsel %vm555, %v554, 0.0
          %557 = vadd.xlane.f32.xlu0 %v556
          %v558 = vpop.xlane.xlu0 %557
          %v559 = vrot.slane %v558, 4
          %v560 = vadd.f32 %v558, %v559
          %v561 = vrot.slane %v560, 2
          %v562 = vadd.f32 %v560, %v561
          %v563 = vrot.slane %v562, 1
          %v564 = vadd.f32 %v562, %v563
          %s565 = vtos %v564
          %s566 = sadd.f32 %s565, 1e-08
          %v567 = vstv %s566
          %v568 = vrcp.pop %v567
          %v569 = vmul.f32 %v567, %v568
          %v570 = vsub.f32 1.0, %v569
          %v571 = vmul.f32 %v568, %v570
          %v572 = vadd.f32 %v568, %v571
          %vm573 = vweird.f32 %v567
          %vm574 = vweird.f32 %v568
          %vm575 = vmor %vm573, %vm574
          %v576 = vsel %vm575, %v568, %v572
          %v577 = vand.u32 2147483647, %v567
          %vm578 = vcmp.eq.f32.partialorder %v577, 8.507059e+37
          %v579 = vand.u32 %v567, 2147483648
          %v580 = vor.u32 1.1754944e-38, %v579
          %v581 = vsel %vm578, %v580, %v576
          %s582 = vtos %v581
          %s583 = smul.f32 %s552, %s582
          %v584 = vstv %s583
          %vm585 = vcmask 0
          %586 = vst.msk [vmem:[%s220] sm:$0x1] %vm585, %v584
        $region44: #{tpu_custom_call.1} parent=27 // pred_fallthru
          _
        %p587 = scmp.lt.s32.totalorder %s23, 1
        %s588 = scalar_select %p587, %s23, 1
        %s589 = scalar_lea.vmem %s2, %s588
        // Predicated region
        $region45: #{tpu_custom_call.1} parent=27 // pred_check
          %p590 = pneg %p105
        $region46: #{tpu_custom_call.1} parent=27 // pred_check_branch
          %592 = sbr.rel (%p590) target = $region48
        $region47: #{tpu_custom_call.1} parent=27 // pred_region
          _
        $region48: #{tpu_custom_call.1} parent=27 // pred_fallthru
          _
      $region28: #{tpu_custom_call.1} parent=5 // pred_fallthru
        _
      %p593 = scmp.le.s32.totalorder 2, %s14
      // Predicated region
      $region49: #{tpu_custom_call.1} parent=5 // pred_check
        %p594 = pneg %p593
      $region50: #{tpu_custom_call.1} parent=5 // pred_check_branch
        %596 = sbr.rel (%p594) target = $region52
      $region51: #{tpu_custom_call.1} parent=5 // pred_region
        %s597 = ssub.s32 %s14, 2
        // Predicated region
        $region53: #{tpu_custom_call.1} parent=51 // pred_check
          %p598 = pneg %p111
        $region54: #{tpu_custom_call.1} parent=51 // pred_check_branch
          %600 = sbr.rel (%p598) target = $region56
        $region55: #{tpu_custom_call.1} parent=51 // pred_region
          %p601 = scmp.lt.s32.totalorder %s25, 1
          %s602 = scalar_select %p601, %s25, 1
          %s603 = scalar_lea.vmem %s2, %s602
        $region56: #{tpu_custom_call.1} parent=51 // pred_fallthru
          _
      $region52: #{tpu_custom_call.1} parent=5 // pred_fallthru
        _
    $region6: #{tpu_custom_call.1} parent=1 // loop_footer
      %s18 = sadd.s32 1, %s14
    $region7: #{tpu_custom_call.1} parent=1 // loop_footer_branch
      %13 = sbr.rel target = $region3
    $region8: #{tpu_custom_call.1} parent=1 // loop_exit
      _
    %604 = vsyncpa [#allocation6], 1
    %s605 = scalar_lea.sflag [#allocation6], 1
    %606 = vsyncpa %s605, 1
    %607 = vsyncpa [#allocation8], 1
    %s608 = scalar_lea.sflag [#allocation8], 1
    %609 = vsyncpa %s608, 1

</llo_original>
